<compile_context>
chip_gen: v5e
topology: v5e:2x2
jax: 0.10.0
libtpu: 0.0.40
codegen_flags: <defaults>
</compile_context>

<pallas_src>
import jax
import jax.numpy as jnp
import numpy as np
from jax import lax
from jax.experimental import pallas as pl
from jax.experimental.pallas import tpu as pltpu

# ----- small, module-consistent sizes -----
B = 2            # batch
S = 16           # sequence length
D = 32           # hidden size
V = 64           # vocab size
NEW_TOKENS = 5   # args.new_tokens
NUM_LABELS = 3   # len(prompt_label_idx); mlp input dim is hidden*3, so this must be 3
N_WORDS = 4      # tokens per prompt label head


# ---------------------------------------------------------------------------
# Single fused kernel: BiaffineSelfAttention -> mlp -> LabelGRUCell -> mlp2 -> logits
#
# ws_ref   (10D, D): rows [0:3D]=W1, [3D:4D]=W_biaffine, [4D:5D]=W2, [5D:6D]=Wih,
#                    [6D:7D]=W3, [7D:10D]=W4^T
# bias_ref (6, 3D) : rows b_biaffine, b1, b2, 2*bih, b3 (first D lanes), b4 (full 3D)
# e_ref    (3D, H*Nw): block-diagonal word-embedding slab; y @ e gives all head logits
# ---------------------------------------------------------------------------
def fused_kernel(hs_ref, cls_ref, ws_ref, bias_ref, e_ref, out_ref):
    f32 = jnp.float32
    mm  = (((1,), (0,)), ((), ()))   # a @ b
    mtm = (((0,), (0,)), ((), ()))   # a^T @ b
    mmt = (((1,), (1,)), ((), ()))   # a @ b^T
    bsz, nl, dh = hs_ref.shape       # (B, NUM_LABELS, D)

    # --- hoisted loads: biases (read once, reused for every batch row) ---
    b_biaf = bias_ref[pl.ds(0, 1), pl.ds(0, dh)]
    b1     = bias_ref[pl.ds(1, 1), pl.ds(0, dh)]
    b2     = bias_ref[pl.ds(2, 1), pl.ds(0, dh)]
    bih2   = bias_ref[pl.ds(3, 1), pl.ds(0, dh)]      # 2 * bias_ih (pre-folded)
    b3     = bias_ref[pl.ds(4, 1), pl.ds(0, dh)]
    b4     = bias_ref[pl.ds(5, 1), :]                 # (1, 3D)

    # --- hoisted loads: weight slab sub-blocks ---
    w1_blk  = [ws_ref[pl.ds(l * dh, dh), :] for l in range(nl)]   # 3 x (D, D)
    w_biaf  = ws_ref[pl.ds(3 * dh, dh), :]
    w2      = ws_ref[pl.ds(4 * dh, dh), :]
    wih     = ws_ref[pl.ds(5 * dh, dh), :]
    w3      = ws_ref[pl.ds(6 * dh, dh), :]
    w4t     = ws_ref[pl.ds(7 * dh, 3 * dh), :]                    # (3D, D) = W4^T
    emb_blk = e_ref[...]                                          # (3D, H*Nw)

    ys = []
    for b in range(bsz):                              # B=2: unrolled, no grid
        xb   = hs_ref[b]                              # (L, D)
        clsb = cls_ref[pl.ds(b, 1), :]                # (1, D)

        # --- BiaffineSelfAttention: softmax(x^T (xW) + b, dim=-1); ctx = x @ attn^T
        xw  = lax.dot_general(xb, w_biaf, mm, preferred_element_type=f32)   # (L, D)
        att = lax.dot_general(xb, xw, mtm, preferred_element_type=f32)      # (D, D)
        att = att + b_biaf
        att = att - jnp.max(att, axis=-1, keepdims=True)
        ex  = jnp.exp(att)
        prob = ex * pl.reciprocal(jnp.sum(ex, axis=-1, keepdims=True), approx=True)
        ctx = lax.dot_general(xb, prob, mmt, preferred_element_type=f32)    # (L, D)

        # --- mlp: Linear(3D, D) on flattened ctx (decomposed over the L rows) -> ReLU -> Linear(D, D)
        h = b1
        for l in range(nl):
            h = h + lax.dot_general(ctx[l:l + 1, :], w1_blk[l], mm,
                                    preferred_element_type=f32)
        h = jnp.maximum(h, 0.0)
        h = lax.dot_general(h, w2, mm, preferred_element_type=f32) + b2     # (1, D)

        # --- LabelGRUCell(x=cls, hid=h): r = sigmoid(cls@Wih + bih + h@Wih + bih); return r*cls + h
        #     folded as (cls+h)@Wih + 2*bih; weight_hh/bias_hh are dead in the returned value.
        r = jax.nn.sigmoid(
            lax.dot_general(clsb + h, wih, mm, preferred_element_type=f32) + bih2)
        g = r * clsb + h                                                    # (1, D)

        # --- mlp2: Linear(D, D) -> ReLU -> Linear(D, 3D)   (W4 stored transposed in the slab)
        y = jnp.maximum(
            lax.dot_general(g, w3, mm, preferred_element_type=f32) + b3, 0.0)
        y = lax.dot_general(y, w4t, mmt, preferred_element_type=f32) + b4   # (1, 3D)
        ys.append(y)

    # --- all per-prompt-label logits for the whole batch in one matmul + one store
    y_all = jnp.concatenate(ys, axis=0)                                     # (B, 3D)
    out_ref[...] = lax.dot_general(y_all, emb_blk, mm,
                                   preferred_element_type=f32)              # (B, H*Nw)


def fused_prompt_head(hs_sel, cls, p):
    """Pack params into dense slabs and run the single fused Pallas kernel."""
    dh = D
    ws = jnp.concatenate(
        [p['w1'], p['w_biaf'], p['w2'], p['wih'], p['w3'], p['w4'].T], axis=0)  # (10D, D)

    def row(v):  # (D,) -> (1, 3D) zero-padded row
        return jnp.pad(v, (0, 3 * dh - v.shape[0]))[None, :]

    bs = jnp.concatenate([row(p['b_biaf']), row(p['b1']), row(p['b2']),
                          row(2.0 * p['bih']), row(p['b3']), p['b4'][None, :]],
                         axis=0)                                                 # (6, 3D)

    # Block-diagonal embedding slab: E[h*D+d, h*Nw+n] = word_emb[prompt_label_idx[h, n], d]
    emb_sel = p['word_emb'][p['prompt_label_idx']]                                  # (H, Nw, D)
    eye_h = jnp.eye(NUM_LABELS, dtype=emb_sel.dtype)
    emb_blk = jnp.einsum('hnd,hg->hdgn', emb_sel, eye_h).reshape(
        NUM_LABELS * dh, NUM_LABELS * N_WORDS)                                      # (3D, H*Nw)

    vmem = pl.BlockSpec(memory_space=pltpu.MemorySpace.VMEM)
    return pl.pallas_call(
        fused_kernel,
        out_shape=jax.ShapeDtypeStruct((hs_sel.shape[0], NUM_LABELS * N_WORDS), jnp.float32),
        in_specs=[vmem] * 5,
        out_specs=vmem,
    )(hs_sel, cls, ws, bs, emb_blk)


# ---------------------------------------------------------------------------
# Full forward (glue in plain JAX, compute in the fused Pallas kernel)
# ---------------------------------------------------------------------------
def model_forward(p, input_ids, attention_mask, token_type_ids,
                  input_flags, mlm_labels, labels):
    # embedding merge
    raw = p['word_emb'][input_ids]                                     # (B, S, D)
    new = p['extra_emb'][input_flags]                                  # (B, S, D)
    inputs_embeds = jnp.where(input_flags[..., None] > 0, new, raw)

    # TODO(synk): self.model is a pretrained transformer (from_pretrained) with no
    # Pallas equivalent here; replaced by a deterministic single-layer tanh encoder
    # producing (hidden_states, cls). The unused self.lstm / self.classifier are omitted.
    x = inputs_embeds * attention_mask[..., None].astype(inputs_embeds.dtype)
    hidden_full = jnp.tanh(x @ p['w_enc'])                             # (B, S, D)
    cls = jnp.tanh(hidden_full[:, 0, :] @ p['w_pool'] + p['b_pool'])   # (B, D)

    # hidden_states[mlm_labels >= 0].view(B, NUM_LABELS, -1)
    # (exactly NUM_LABELS valid positions per row; stable sort keeps ascending order,
    #  matching PyTorch's row-major boolean-mask select)
    pos = jnp.argsort(jnp.where(mlm_labels >= 0, 0, 1), axis=1, stable=True)[:, :NUM_LABELS]
    hs_sel = jnp.take_along_axis(hidden_full, pos[:, :, None], axis=1)  # (B, NUM_LABELS, D)

    dense = fused_prompt_head(hs_sel, cls, p)                          # (B, NUM_LABELS*N_WORDS)
    # preserve module semantics: list of per-head logits (tiny XLA slices)
    return [dense[:, i * N_WORDS:(i + 1) * N_WORDS] for i in range(NUM_LABELS)]


# ---------------------------------------------------------------------------
# Pure-JAX reference of the same math (for a sanity check)
# ---------------------------------------------------------------------------
def reference_forward(p, input_ids, attention_mask, token_type_ids,
                      input_flags, mlm_labels, labels):
    raw = p['word_emb'][input_ids]
    new = p['extra_emb'][input_flags]
    inputs_embeds = jnp.where(input_flags[..., None] > 0, new, raw)
    x = inputs_embeds * attention_mask[..., None].astype(inputs_embeds.dtype)
    hidden_full = jnp.tanh(x @ p['w_enc'])
    cls = jnp.tanh(hidden_full[:, 0, :] @ p['w_pool'] + p['b_pool'])
    pos = jnp.argsort(jnp.where(mlm_labels >= 0, 0, 1), axis=1, stable=True)[:, :NUM_LABELS]
    hs_sel = jnp.take_along_axis(hidden_full, pos[:, :, None], axis=1)

    xw = jnp.einsum('ijk,kl->ijl', hs_sel, p['w_biaf'])
    att = jnp.einsum('ijk,ijl->ikl', hs_sel, xw) + p['b_biaf'][None, None, :]
    att = jax.nn.softmax(att, axis=2)
    ctx = jnp.einsum('bld,bkd->blk', hs_sel, att)

    hs_flat = ctx.reshape(ctx.shape[0], -1)
    h = jnp.maximum(hs_flat @ p['w1'] + p['b1'], 0.0) @ p['w2'] + p['b2']
    r = jax.nn.sigmoid(cls @ p['wih'] + p['bih'] + h @ p['wih'] + p['bih'])
    g = r * cls + h
    y = jnp.maximum(g @ p['w3'] + p['b3'], 0.0) @ p['w4'] + p['b4']
    hs3 = y.reshape(y.shape[0], NUM_LABELS, D)
    return [hs3[:, i, :] @ p['word_emb'][p['prompt_label_idx'][i]].T
            for i in range(NUM_LABELS)]


# ---------------------------------------------------------------------------
if __name__ == "__main__":
    key = jax.random.PRNGKey(0)
    ks = jax.random.split(key, 12)

    def u(k, shape, scale):
        return jax.random.uniform(k, shape, jnp.float32, -scale, scale)

    xavier = float(np.sqrt(6.0 / (D + D)))
    params = {
        'word_emb': jax.random.normal(ks[0], (V, D), jnp.float32) * 0.1,
        'extra_emb': jax.random.normal(ks[1], (NEW_TOKENS, D), jnp.float32) * 0.1,
        'w_enc': u(ks[2], (D, D), 0.3),
        'w_pool': u(ks[3], (D, D), 0.3),
        'b_pool': jnp.zeros((D,), jnp.float32),
        'w_biaf': u(ks[4], (D, D), xavier),          # xavier_uniform_
        'b_biaf': jnp.zeros((D,), jnp.float32),      # zeros_
        'w1': u(ks[5], (3 * D, D), 0.1), 'b1': jnp.zeros((D,), jnp.float32),
        'w2': u(ks[6], (D, D), 0.1),     'b2': jnp.zeros((D,), jnp.float32),
        'wih': u(ks[7], (D, D), 0.1),    'bih': jnp.zeros((D,), jnp.float32),
        'whh': u(ks[8], (D, D), 0.1),    'bhh': jnp.zeros((D,), jnp.float32),  # dead in forward
        'w3': u(ks[9], (D, D), 0.1),     'b3': jnp.zeros((D,), jnp.float32),
        'w4': u(ks[10], (D, 3 * D), 0.1), 'b4': jnp.zeros((3 * D,), jnp.float32),
        'prompt_label_idx': (jnp.arange(NUM_LABELS * N_WORDS, dtype=jnp.int32)
                             .reshape(NUM_LABELS, N_WORDS) + 10),
    }

    ik = jax.random.split(jax.random.PRNGKey(1), 4)
    input_ids = jax.random.randint(ik[0], (B, S), 0, V, dtype=jnp.int32)
    attention_mask = jnp.ones((B, S), jnp.int32)
    token_type_ids = jnp.zeros((B, S), jnp.int32)
    input_flags = jnp.where(jax.random.uniform(ik[1], (B, S)) < 0.2,
                            jax.random.randint(ik[2], (B, S), 1, NEW_TOKENS, dtype=jnp.int32),
                            0).astype(jnp.int32)
    mlm_labels = jnp.full((B, S), -100, jnp.int32)
    mask_pos = jnp.array([[1, 5, 9], [2, 6, 10]], jnp.int32)
    mlm_labels = mlm_labels.at[jnp.arange(B)[:, None], mask_pos].set(
        jnp.array([[3, 7, 11], [4, 8, 12]], jnp.int32))
    labels = jnp.array([1, 2], jnp.int32)

    fwd = jax.jit(model_forward)
    logits = fwd(params, input_ids, attention_mask, token_type_ids,
                 input_flags, mlm_labels, labels)
    logits = jax.block_until_ready(logits)

    ref = reference_forward(params, input_ids, attention_mask, token_type_ids,
                            input_flags, mlm_labels, labels)
    max_err = max(float(jnp.max(jnp.abs(a - b))) for a, b in zip(logits, ref))
    assert all(l.shape == (B, N_WORDS) for l in logits)
    assert max_err < 1e-2, f"mismatch vs reference: {max_err}"

    print("KERNEL_OK")
</pallas_src>

<mosaic_0001>
module attributes {stable_mosaic.version = 11 : i64} {
  func.func @fused_kernel(%arg0: memref<2x3x32xf32, #tpu.memory_space<vmem>>, %arg1: memref<2x32xf32, #tpu.memory_space<vmem>>, %arg2: memref<320x32xf32, #tpu.memory_space<vmem>>, %arg3: memref<6x96xf32, #tpu.memory_space<vmem>>, %arg4: memref<96x12xf32, #tpu.memory_space<vmem>>, %arg5: memref<2x12xf32, #tpu.memory_space<vmem>>) attributes {dimension_semantics = [], scalar_prefetch = 0 : i64, scratch_operands = 0 : i64, tpu.core_type = #tpu.core_type<tc>} {
    %c0 = arith.constant 0 : index
    %c0_0 = arith.constant 0 : index
    %0 = vector.load %arg3[%c0, %c0_0] : memref<6x96xf32, #tpu.memory_space<vmem>>, vector<1x32xf32>
    %c1 = arith.constant 1 : index
    %c0_1 = arith.constant 0 : index
    %1 = vector.load %arg3[%c1, %c0_1] : memref<6x96xf32, #tpu.memory_space<vmem>>, vector<1x32xf32>
    %c2 = arith.constant 2 : index
    %c0_2 = arith.constant 0 : index
    %2 = vector.load %arg3[%c2, %c0_2] : memref<6x96xf32, #tpu.memory_space<vmem>>, vector<1x32xf32>
    %c3 = arith.constant 3 : index
    %c0_3 = arith.constant 0 : index
    %3 = vector.load %arg3[%c3, %c0_3] : memref<6x96xf32, #tpu.memory_space<vmem>>, vector<1x32xf32>
    %c4 = arith.constant 4 : index
    %c0_4 = arith.constant 0 : index
    %4 = vector.load %arg3[%c4, %c0_4] : memref<6x96xf32, #tpu.memory_space<vmem>>, vector<1x32xf32>
    %c5 = arith.constant 5 : index
    %c0_5 = arith.constant 0 : index
    %5 = vector.load %arg3[%c5, %c0_5] : memref<6x96xf32, #tpu.memory_space<vmem>>, vector<1x96xf32>
    %c0_6 = arith.constant 0 : index
    %c0_7 = arith.constant 0 : index
    %6 = vector.load %arg2[%c0_6, %c0_7] : memref<320x32xf32, #tpu.memory_space<vmem>>, vector<32x32xf32>
    %c32 = arith.constant 32 : index
    %c0_8 = arith.constant 0 : index
    %7 = vector.load %arg2[%c32, %c0_8] : memref<320x32xf32, #tpu.memory_space<vmem>>, vector<32x32xf32>
    %c64 = arith.constant 64 : index
    %c0_9 = arith.constant 0 : index
    %8 = vector.load %arg2[%c64, %c0_9] : memref<320x32xf32, #tpu.memory_space<vmem>>, vector<32x32xf32>
    %c96 = arith.constant 96 : index
    %c0_10 = arith.constant 0 : index
    %9 = vector.load %arg2[%c96, %c0_10] : memref<320x32xf32, #tpu.memory_space<vmem>>, vector<32x32xf32>
    %c128 = arith.constant 128 : index
    %c0_11 = arith.constant 0 : index
    %10 = vector.load %arg2[%c128, %c0_11] : memref<320x32xf32, #tpu.memory_space<vmem>>, vector<32x32xf32>
    %c160 = arith.constant 160 : index
    %c0_12 = arith.constant 0 : index
    %11 = vector.load %arg2[%c160, %c0_12] : memref<320x32xf32, #tpu.memory_space<vmem>>, vector<32x32xf32>
    %c192 = arith.constant 192 : index
    %c0_13 = arith.constant 0 : index
    %12 = vector.load %arg2[%c192, %c0_13] : memref<320x32xf32, #tpu.memory_space<vmem>>, vector<32x32xf32>
    %c224 = arith.constant 224 : index
    %c0_14 = arith.constant 0 : index
    %13 = vector.load %arg2[%c224, %c0_14] : memref<320x32xf32, #tpu.memory_space<vmem>>, vector<96x32xf32>
    %c0_15 = arith.constant 0 : index
    %c0_16 = arith.constant 0 : index
    %14 = vector.load %arg4[%c0_15, %c0_16] : memref<96x12xf32, #tpu.memory_space<vmem>>, vector<96x12xf32>
    %c0_17 = arith.constant 0 : index
    %c0_18 = arith.constant 0 : index
    %c0_19 = arith.constant 0 : index
    %15 = vector.load %arg0[%c0_17, %c0_18, %c0_19] : memref<2x3x32xf32, #tpu.memory_space<vmem>>, vector<1x3x32xf32>
    %16 = vector.shape_cast %15 : vector<1x3x32xf32> to vector<3x32xf32>
    %c0_20 = arith.constant 0 : index
    %c0_21 = arith.constant 0 : index
    %17 = vector.load %arg1[%c0_20, %c0_21] : memref<2x32xf32, #tpu.memory_space<vmem>>, vector<1x32xf32>
    %cst = arith.constant dense<0.000000e+00> : vector<3x32xf32>
    %18 = tpu.matmul %16, %9, %cst {dimension_numbers = #tpu.dot_dimension_numbers<[1], [0], [0], [1], [0, 0, 1, 1], [], []>} : vector<3x32xf32>, vector<32x32xf32>, vector<3x32xf32> -> vector<3x32xf32>
    %cst_22 = arith.constant dense<0.000000e+00> : vector<32x32xf32>
    %19 = tpu.matmul %16, %18, %cst_22 {dimension_numbers = #tpu.dot_dimension_numbers<[0], [0], [1], [1], [0, 1, 1, 1], [], []>} : vector<3x32xf32>, vector<3x32xf32>, vector<32x32xf32> -> vector<32x32xf32>
    %20 = vector.broadcast %0 : vector<1x32xf32> to vector<32x32xf32>
    %21 = arith.addf %19, %20 : vector<32x32xf32>
    %cst_23 = arith.constant dense<0xFF800000> : vector<32xf32>
    %22 = vector.multi_reduction <maximumf>, %21, %cst_23 [1] : vector<32x32xf32> to vector<32xf32>
    %23 = vector.shape_cast %22 : vector<32xf32> to vector<32x1xf32>
    %24 = vector.broadcast %23 : vector<32x1xf32> to vector<32x32xf32>
    %25 = arith.subf %21, %24 : vector<32x32xf32>
    %26 = math.exp %25 : vector<32x32xf32>
    %cst_24 = arith.constant dense<0.000000e+00> : vector<32xf32>
    %27 = vector.multi_reduction <add>, %26, %cst_24 [1] : vector<32x32xf32> to vector<32xf32>
    %28 = vector.shape_cast %27 : vector<32xf32> to vector<32x1xf32>
    %29 = tpu.reciprocal %28 {approx = true} : vector<32x1xf32> -> vector<32x1xf32>
    %30 = vector.broadcast %29 : vector<32x1xf32> to vector<32x32xf32>
    %31 = arith.mulf %26, %30 : vector<32x32xf32>
    %cst_25 = arith.constant dense<0.000000e+00> : vector<3x32xf32>
    %32 = tpu.matmul %16, %31, %cst_25 {dimension_numbers = #tpu.dot_dimension_numbers<[1], [1], [0], [0], [0, 0, 1, 0], [], []>} : vector<3x32xf32>, vector<32x32xf32>, vector<3x32xf32> -> vector<3x32xf32>
    %33 = vector.extract_strided_slice %32 {offsets = [0, 0], sizes = [1, 32], strides = [1, 1]} : vector<3x32xf32> to vector<1x32xf32>
    %cst_26 = arith.constant dense<0.000000e+00> : vector<1x32xf32>
    %34 = tpu.matmul %33, %6, %cst_26 {dimension_numbers = #tpu.dot_dimension_numbers<[1], [0], [0], [1], [0, 0, 1, 1], [], []>} : vector<1x32xf32>, vector<32x32xf32>, vector<1x32xf32> -> vector<1x32xf32>
    %35 = arith.addf %1, %34 : vector<1x32xf32>
    %36 = vector.extract_strided_slice %32 {offsets = [1, 0], sizes = [1, 32], strides = [1, 1]} : vector<3x32xf32> to vector<1x32xf32>
    %cst_27 = arith.constant dense<0.000000e+00> : vector<1x32xf32>
    %37 = tpu.matmul %36, %7, %cst_27 {dimension_numbers = #tpu.dot_dimension_numbers<[1], [0], [0], [1], [0, 0, 1, 1], [], []>} : vector<1x32xf32>, vector<32x32xf32>, vector<1x32xf32> -> vector<1x32xf32>
    %38 = arith.addf %35, %37 : vector<1x32xf32>
    %39 = vector.extract_strided_slice %32 {offsets = [2, 0], sizes = [1, 32], strides = [1, 1]} : vector<3x32xf32> to vector<1x32xf32>
    %cst_28 = arith.constant dense<0.000000e+00> : vector<1x32xf32>
    %40 = tpu.matmul %39, %8, %cst_28 {dimension_numbers = #tpu.dot_dimension_numbers<[1], [0], [0], [1], [0, 0, 1, 1], [], []>} : vector<1x32xf32>, vector<32x32xf32>, vector<1x32xf32> -> vector<1x32xf32>
    %41 = arith.addf %38, %40 : vector<1x32xf32>
    %cst_29 = arith.constant 0.000000e+00 : f32
    %42 = vector.broadcast %cst_29 : f32 to vector<1x32xf32>
    %43 = arith.maximumf %41, %42 : vector<1x32xf32>
    %cst_30 = arith.constant dense<0.000000e+00> : vector<1x32xf32>
    %44 = tpu.matmul %43, %10, %cst_30 {dimension_numbers = #tpu.dot_dimension_numbers<[1], [0], [0], [1], [0, 0, 1, 1], [], []>} : vector<1x32xf32>, vector<32x32xf32>, vector<1x32xf32> -> vector<1x32xf32>
    %45 = arith.addf %44, %2 : vector<1x32xf32>
    %46 = arith.addf %17, %45 : vector<1x32xf32>
    %cst_31 = arith.constant dense<0.000000e+00> : vector<1x32xf32>
    %47 = tpu.matmul %46, %11, %cst_31 {dimension_numbers = #tpu.dot_dimension_numbers<[1], [0], [0], [1], [0, 0, 1, 1], [], []>} : vector<1x32xf32>, vector<32x32xf32>, vector<1x32xf32> -> vector<1x32xf32>
    %48 = arith.addf %47, %3 : vector<1x32xf32>
    %49 = arith.negf %48 : vector<1x32xf32>
    %50 = math.exp %49 : vector<1x32xf32>
    %cst_32 = arith.constant 1.000000e+00 : f32
    %51 = vector.broadcast %cst_32 : f32 to vector<1x32xf32>
    %52 = arith.addf %51, %50 : vector<1x32xf32>
    %53 = arith.divf %51, %52 : vector<1x32xf32>
    %54 = arith.mulf %53, %17 : vector<1x32xf32>
    %55 = arith.addf %54, %45 : vector<1x32xf32>
    %cst_33 = arith.constant dense<0.000000e+00> : vector<1x32xf32>
    %56 = tpu.matmul %55, %12, %cst_33 {dimension_numbers = #tpu.dot_dimension_numbers<[1], [0], [0], [1], [0, 0, 1, 1], [], []>} : vector<1x32xf32>, vector<32x32xf32>, vector<1x32xf32> -> vector<1x32xf32>
    %57 = arith.addf %56, %4 : vector<1x32xf32>
    %cst_34 = arith.constant 0.000000e+00 : f32
    %58 = vector.broadcast %cst_34 : f32 to vector<1x32xf32>
    %59 = arith.maximumf %57, %58 : vector<1x32xf32>
    %cst_35 = arith.constant dense<0.000000e+00> : vector<1x96xf32>
    %60 = tpu.matmul %59, %13, %cst_35 {dimension_numbers = #tpu.dot_dimension_numbers<[1], [1], [0], [0], [0, 0, 1, 0], [], []>} : vector<1x32xf32>, vector<96x32xf32>, vector<1x96xf32> -> vector<1x96xf32>
    %61 = arith.addf %60, %5 : vector<1x96xf32>
    %c1_36 = arith.constant 1 : index
    %c0_37 = arith.constant 0 : index
    %c0_38 = arith.constant 0 : index
    %62 = vector.load %arg0[%c1_36, %c0_37, %c0_38] : memref<2x3x32xf32, #tpu.memory_space<vmem>>, vector<1x3x32xf32>
    %63 = vector.shape_cast %62 : vector<1x3x32xf32> to vector<3x32xf32>
    %c1_39 = arith.constant 1 : index
    %c0_40 = arith.constant 0 : index
    %64 = vector.load %arg1[%c1_39, %c0_40] : memref<2x32xf32, #tpu.memory_space<vmem>>, vector<1x32xf32>
    %cst_41 = arith.constant dense<0.000000e+00> : vector<3x32xf32>
    %65 = tpu.matmul %63, %9, %cst_41 {dimension_numbers = #tpu.dot_dimension_numbers<[1], [0], [0], [1], [0, 0, 1, 1], [], []>} : vector<3x32xf32>, vector<32x32xf32>, vector<3x32xf32> -> vector<3x32xf32>
    %cst_42 = arith.constant dense<0.000000e+00> : vector<32x32xf32>
    %66 = tpu.matmul %63, %65, %cst_42 {dimension_numbers = #tpu.dot_dimension_numbers<[0], [0], [1], [1], [0, 1, 1, 1], [], []>} : vector<3x32xf32>, vector<3x32xf32>, vector<32x32xf32> -> vector<32x32xf32>
    %67 = vector.broadcast %0 : vector<1x32xf32> to vector<32x32xf32>
    %68 = arith.addf %66, %67 : vector<32x32xf32>
    %cst_43 = arith.constant dense<0xFF800000> : vector<32xf32>
    %69 = vector.multi_reduction <maximumf>, %68, %cst_43 [1] : vector<32x32xf32> to vector<32xf32>
    %70 = vector.shape_cast %69 : vector<32xf32> to vector<32x1xf32>
    %71 = vector.broadcast %70 : vector<32x1xf32> to vector<32x32xf32>
    %72 = arith.subf %68, %71 : vector<32x32xf32>
    %73 = math.exp %72 : vector<32x32xf32>
    %cst_44 = arith.constant dense<0.000000e+00> : vector<32xf32>
    %74 = vector.multi_reduction <add>, %73, %cst_44 [1] : vector<32x32xf32> to vector<32xf32>
    %75 = vector.shape_cast %74 : vector<32xf32> to vector<32x1xf32>
    %76 = tpu.reciprocal %75 {approx = true} : vector<32x1xf32> -> vector<32x1xf32>
    %77 = vector.broadcast %76 : vector<32x1xf32> to vector<32x32xf32>
    %78 = arith.mulf %73, %77 : vector<32x32xf32>
    %cst_45 = arith.constant dense<0.000000e+00> : vector<3x32xf32>
    %79 = tpu.matmul %63, %78, %cst_45 {dimension_numbers = #tpu.dot_dimension_numbers<[1], [1], [0], [0], [0, 0, 1, 0], [], []>} : vector<3x32xf32>, vector<32x32xf32>, vector<3x32xf32> -> vector<3x32xf32>
    %80 = vector.extract_strided_slice %79 {offsets = [0, 0], sizes = [1, 32], strides = [1, 1]} : vector<3x32xf32> to vector<1x32xf32>
    %cst_46 = arith.constant dense<0.000000e+00> : vector<1x32xf32>
    %81 = tpu.matmul %80, %6, %cst_46 {dimension_numbers = #tpu.dot_dimension_numbers<[1], [0], [0], [1], [0, 0, 1, 1], [], []>} : vector<1x32xf32>, vector<32x32xf32>, vector<1x32xf32> -> vector<1x32xf32>
    %82 = arith.addf %1, %81 : vector<1x32xf32>
    %83 = vector.extract_strided_slice %79 {offsets = [1, 0], sizes = [1, 32], strides = [1, 1]} : vector<3x32xf32> to vector<1x32xf32>
    %cst_47 = arith.constant dense<0.000000e+00> : vector<1x32xf32>
    %84 = tpu.matmul %83, %7, %cst_47 {dimension_numbers = #tpu.dot_dimension_numbers<[1], [0], [0], [1], [0, 0, 1, 1], [], []>} : vector<1x32xf32>, vector<32x32xf32>, vector<1x32xf32> -> vector<1x32xf32>
    %85 = arith.addf %82, %84 : vector<1x32xf32>
    %86 = vector.extract_strided_slice %79 {offsets = [2, 0], sizes = [1, 32], strides = [1, 1]} : vector<3x32xf32> to vector<1x32xf32>
    %cst_48 = arith.constant dense<0.000000e+00> : vector<1x32xf32>
    %87 = tpu.matmul %86, %8, %cst_48 {dimension_numbers = #tpu.dot_dimension_numbers<[1], [0], [0], [1], [0, 0, 1, 1], [], []>} : vector<1x32xf32>, vector<32x32xf32>, vector<1x32xf32> -> vector<1x32xf32>
    %88 = arith.addf %85, %87 : vector<1x32xf32>
    %cst_49 = arith.constant 0.000000e+00 : f32
    %89 = vector.broadcast %cst_49 : f32 to vector<1x32xf32>
    %90 = arith.maximumf %88, %89 : vector<1x32xf32>
    %cst_50 = arith.constant dense<0.000000e+00> : vector<1x32xf32>
    %91 = tpu.matmul %90, %10, %cst_50 {dimension_numbers = #tpu.dot_dimension_numbers<[1], [0], [0], [1], [0, 0, 1, 1], [], []>} : vector<1x32xf32>, vector<32x32xf32>, vector<1x32xf32> -> vector<1x32xf32>
    %92 = arith.addf %91, %2 : vector<1x32xf32>
    %93 = arith.addf %64, %92 : vector<1x32xf32>
    %cst_51 = arith.constant dense<0.000000e+00> : vector<1x32xf32>
    %94 = tpu.matmul %93, %11, %cst_51 {dimension_numbers = #tpu.dot_dimension_numbers<[1], [0], [0], [1], [0, 0, 1, 1], [], []>} : vector<1x32xf32>, vector<32x32xf32>, vector<1x32xf32> -> vector<1x32xf32>
    %95 = arith.addf %94, %3 : vector<1x32xf32>
    %96 = arith.negf %95 : vector<1x32xf32>
    %97 = math.exp %96 : vector<1x32xf32>
    %cst_52 = arith.constant 1.000000e+00 : f32
    %98 = vector.broadcast %cst_52 : f32 to vector<1x32xf32>
    %99 = arith.addf %98, %97 : vector<1x32xf32>
    %100 = arith.divf %98, %99 : vector<1x32xf32>
    %101 = arith.mulf %100, %64 : vector<1x32xf32>
    %102 = arith.addf %101, %92 : vector<1x32xf32>
    %cst_53 = arith.constant dense<0.000000e+00> : vector<1x32xf32>
    %103 = tpu.matmul %102, %12, %cst_53 {dimension_numbers = #tpu.dot_dimension_numbers<[1], [0], [0], [1], [0, 0, 1, 1], [], []>} : vector<1x32xf32>, vector<32x32xf32>, vector<1x32xf32> -> vector<1x32xf32>
    %104 = arith.addf %103, %4 : vector<1x32xf32>
    %cst_54 = arith.constant 0.000000e+00 : f32
    %105 = vector.broadcast %cst_54 : f32 to vector<1x32xf32>
    %106 = arith.maximumf %104, %105 : vector<1x32xf32>
    %cst_55 = arith.constant dense<0.000000e+00> : vector<1x96xf32>
    %107 = tpu.matmul %106, %13, %cst_55 {dimension_numbers = #tpu.dot_dimension_numbers<[1], [1], [0], [0], [0, 0, 1, 0], [], []>} : vector<1x32xf32>, vector<96x32xf32>, vector<1x96xf32> -> vector<1x96xf32>
    %108 = arith.addf %107, %5 : vector<1x96xf32>
    %109 = tpu.concatenate %61, %108 in 0 : vector<1x96xf32>, vector<1x96xf32> -> vector<2x96xf32>
    %cst_56 = arith.constant dense<0.000000e+00> : vector<2x12xf32>
    %110 = tpu.matmul %109, %14, %cst_56 {dimension_numbers = #tpu.dot_dimension_numbers<[1], [0], [0], [1], [0, 0, 1, 1], [], []>} : vector<2x96xf32>, vector<96x12xf32>, vector<2x12xf32> -> vector<2x12xf32>
    %c0_57 = arith.constant 0 : index
    %c0_58 = arith.constant 0 : index
    %111 = vector.load %arg5[%c0_57, %c0_58] : memref<2x12xf32, #tpu.memory_space<vmem>>, vector<2x12xf32>
    tpu.vector_store %arg5[%c0_57, %c0_58], %110 {strides = array<i32>} : memref<2x12xf32, #tpu.memory_space<vmem>>, vector<2x12xf32>,
    return
  }
}

</mosaic_0001>

<llo_original>
// kernel: model_forward.1
$region0: #{model_forward.1}
  #allocation0 [shape = 'u32[]', space=smem, size = 0x4, offset = 0x4, fixed_abs, tag = 'smem constant byte address 0x4 - core index']
  #allocation1 [shape = 'u32[72,128]{1,0:T(1,128)}', space=vmem, size = 0x9000, scoped, tag = 'internal scratch']
  %s0 = inlined_call_operand.vmem [shape: f32[2,3,32], index: 0, kind: input, shape index: {}]
  %s1 = inlined_call_operand.vmem [shape: f32[2,32], index: 1, kind: input, shape index: {}]
  %s2 = inlined_call_operand.vmem [shape: f32[320,32], index: 2, kind: input, shape index: {}]
  %s3 = inlined_call_operand.vmem [shape: f32[6,96], index: 3, kind: input, shape index: {}]
  %s4 = inlined_call_operand.vmem [shape: f32[96,12], index: 4, kind: input, shape index: {}]
  %s5 = inlined_call_operand.vmem [shape: f32[2,12], index: 5, kind: output, shape index: {}]
  %s6 = sld [smem:[#allocation0]]
  $region30: #{model_forward.1} parent=0
    _
  %s8 = ssub.s32 1, %s6
  %s9 = scalar_select 0, %s8, %s6
  // Predicated region
  $region2: #{model_forward.1} parent=0 // pred_check
    _
  $region3: #{model_forward.1} parent=0 // pred_check_branch
    %11 = sbr.rel (0) target = $region5
  $region4: #{model_forward.1} parent=0 // pred_region
    _
  $region5: #{model_forward.1} parent=0 // pred_fallthru
    _
  // Predicated region
  $region6: #{model_forward.1} parent=0 // pred_check
    _
  $region7: #{model_forward.1} parent=0 // pred_check_branch
    %13 = sbr.rel (0) target = $region9
  $region8: #{model_forward.1} parent=0 // pred_region
    _
  $region9: #{model_forward.1} parent=0 // pred_fallthru
    _
  // Predicated region
  $region10: #{model_forward.1} parent=0 // pred_check
    _
  $region11: #{model_forward.1} parent=0 // pred_check_branch
    %15 = sbr.rel (0) target = $region13
  $region12: #{model_forward.1} parent=0 // pred_region
    _
  $region13: #{model_forward.1} parent=0 // pred_fallthru
    _
  // Predicated region
  $region14: #{model_forward.1} parent=0 // pred_check
    _
  $region15: #{model_forward.1} parent=0 // pred_check_branch
    %17 = sbr.rel (0) target = $region17
  $region16: #{model_forward.1} parent=0 // pred_region
    _
  $region17: #{model_forward.1} parent=0 // pred_fallthru
    _
  // Predicated region
  $region18: #{model_forward.1} parent=0 // pred_check
    _
  $region19: #{model_forward.1} parent=0 // pred_check_branch
    %19 = sbr.rel (0) target = $region21
  $region20: #{model_forward.1} parent=0 // pred_region
    _
  $region21: #{model_forward.1} parent=0 // pred_fallthru
    _
  %v20 = vld [vmem:[%s3] sm:$0x1]
  %v21 = vld [vmem:[%s3 + $0x1] sm:$0x1]
  %v22 = vld [vmem:[%s3 + $0x2] sm:$0x1]
  %v23 = vld [vmem:[%s3 + $0x3] sm:$0x1]
  %v24 = vld [vmem:[%s3 + $0x4] sm:$0x1]
  %v25 = vld [vmem:[%s3 + $0x5] sm:$0x1]
  %v26 = vld [vmem:[%s2] sm:$0xff]
  %v27 = vld [vmem:[%s2 + $0x8] sm:$0xff]
  %v28 = vld [vmem:[%s2 + $0x10] sm:$0xff]
  %v29 = vld [vmem:[%s2 + $0x18] sm:$0xff]
  %v30 = vld [vmem:[%s2 + $0x20] sm:$0xff]
  %v31 = vld [vmem:[%s2 + $0x28] sm:$0xff]
  %v32 = vld [vmem:[%s2 + $0x30] sm:$0xff]
  %v33 = vld [vmem:[%s2 + $0x38] sm:$0xff]
  %v34 = vld [vmem:[%s2 + $0x40] sm:$0xff]
  %v35 = vld [vmem:[%s2 + $0x48] sm:$0xff]
  %v36 = vld [vmem:[%s2 + $0x50] sm:$0xff]
  %v37 = vld [vmem:[%s2 + $0x58] sm:$0xff]
  %v38 = vld [vmem:[%s2 + $0x60] sm:$0xff]
  %v39 = vld [vmem:[%s2 + $0x68] sm:$0xff]
  %v40 = vld [vmem:[%s2 + $0x70] sm:$0xff]
  %v41 = vld [vmem:[%s2 + $0x78] sm:$0xff]
  %v42 = vld [vmem:[%s2 + $0x80] sm:$0xff]
  %v43 = vld [vmem:[%s2 + $0x88] sm:$0xff]
  %v44 = vld [vmem:[%s2 + $0x90] sm:$0xff]
  %v45 = vld [vmem:[%s2 + $0x98] sm:$0xff]
  %v46 = vld [vmem:[%s2 + $0xa0] sm:$0xff]
  %v47 = vld [vmem:[%s2 + $0xa8] sm:$0xff]
  %v48 = vld [vmem:[%s2 + $0xb0] sm:$0xff]
  %v49 = vld [vmem:[%s2 + $0xb8] sm:$0xff]
  %v50 = vld [vmem:[%s2 + $0xc0] sm:$0xff]
  %v51 = vld [vmem:[%s2 + $0xc8] sm:$0xff]
  %v52 = vld [vmem:[%s2 + $0xd0] sm:$0xff]
  %v53 = vld [vmem:[%s2 + $0xd8] sm:$0xff]
  %v54 = vld [vmem:[%s2 + $0xe0] sm:$0xff]
  %v55 = vld [vmem:[%s2 + $0xe8] sm:$0xff]
  %v56 = vld [vmem:[%s2 + $0xf0] sm:$0xff]
  %v57 = vld [vmem:[%s2 + $0xf8] sm:$0xff]
  %v58 = vld [vmem:[%s2 + $0x100] sm:$0xff]
  %v59 = vld [vmem:[%s2 + $0x108] sm:$0xff]
  %v60 = vld [vmem:[%s2 + $0x110] sm:$0xff]
  %v61 = vld [vmem:[%s2 + $0x118] sm:$0xff]
  %v62 = vld [vmem:[%s2 + $0x120] sm:$0xff]
  %v63 = vld [vmem:[%s2 + $0x128] sm:$0xff]
  %v64 = vld [vmem:[%s2 + $0x130] sm:$0xff]
  %v65 = vld [vmem:[%s2 + $0x138] sm:$0xff]
  %v66 = vld [vmem:[%s4] sm:$0xff]
  %v67 = vld [vmem:[%s4 + $0x8] sm:$0xff]
  %v68 = vld [vmem:[%s4 + $0x10] sm:$0xff]
  %v69 = vld [vmem:[%s4 + $0x18] sm:$0xff]
  %v70 = vld [vmem:[%s4 + $0x20] sm:$0xff]
  %v71 = vld [vmem:[%s4 + $0x28] sm:$0xff]
  %v72 = vld [vmem:[%s4 + $0x30] sm:$0xff]
  %v73 = vld [vmem:[%s4 + $0x38] sm:$0xff]
  %v74 = vld [vmem:[%s4 + $0x40] sm:$0xff]
  %v75 = vld [vmem:[%s4 + $0x48] sm:$0xff]
  %v76 = vld [vmem:[%s4 + $0x50] sm:$0xff]
  %v77 = vld [vmem:[%s4 + $0x58] sm:$0xff]
  %v78 = vld [vmem:[%s0] sm:$0x7]
  %v79 = vld [vmem:[%s1] sm:$0x1]
  %vm80 = vcmask 261120
  %v82 = vsel %vm80, %v78, 0
  %84 = vmatpush.msra.mxu0 0.0
  %85 = vmatpush.msra.mxu0 0.0
  %86 = vmatpush.msra.mxu0 0.0
  %87 = vmatpush.msra.mxu0 0.0
  %88 = vmatpush.msra.mxu0 0.0
  %89 = vmatpush.msra.mxu0 0.0
  %90 = vmatpush.msra.mxu0 0.0
  %91 = vmatpush.msra.mxu0 0.0
  %92 = vmatpush.msra.mxu0 0.0
  %93 = vmatpush.msra.mxu0 0.0
  %94 = vmatpush.msra.mxu0 0.0
  %95 = vmatpush.msra.mxu0 0.0
  %96 = vmatpush.msra.mxu0 %v41
  %97 = vmatpush.msra.mxu0 %v40
  %98 = vmatpush.msra.mxu0 %v39
  %99 = vmatpush.msra.mxu0 %v38
  %100 = vmatmul.f32.gmra.mxu0 %v82
  %v101 = vpop.f32.mrf.mxu0
  %v102 = vadd.f32 0.0, %v101
  %103 = vdwg.mxu0
  %v104 = vperm.slane %v20, 0
  %105 = vxpose.xlu0.b32.start [1/16] %v78, 128
  %106 = vxpose.xlu0.b32.cont [2/16] 0.0, 128
  %107 = vxpose.xlu0.b32.cont [3/16] 0.0, 128
  %108 = vxpose.xlu0.b32.cont [4/16] 0.0, 128
  %109 = vxpose.xlu0.b32.cont [5/16] 0.0, 128
  %110 = vxpose.xlu0.b32.cont [6/16] 0.0, 128
  %111 = vxpose.xlu0.b32.cont [7/16] 0.0, 128
  %112 = vxpose.xlu0.b32.cont [8/16] 0.0, 128
  %113 = vxpose.xlu0.b32.cont [9/16] 0.0, 128
  %114 = vxpose.xlu0.b32.cont [10/16] 0.0, 128
  %115 = vxpose.xlu0.b32.cont [11/16] 0.0, 128
  %116 = vxpose.xlu0.b32.cont [12/16] 0.0, 128
  %117 = vxpose.xlu0.b32.cont [13/16] 0.0, 128
  %118 = vxpose.xlu0.b32.cont [14/16] 0.0, 128
  %119 = vxpose.xlu0.b32.cont [15/16] 0.0, 128
  %120 = vxpose.xlu0.b32.end [16/16] 0.0, 128
  %v121 = vpop.trf.xlu0
  %v122 = vpop.trf.xlu0
  %v123 = vpop.trf.xlu0
  %v124 = vpop.trf.xlu0
  %v125 = vpop.trf.xlu0
  %v126 = vpop.trf.xlu0
  %v127 = vpop.trf.xlu0
  %v128 = vpop.trf.xlu0
  %v129 = vpop.trf.xlu0
  %v130 = vpop.trf.xlu0
  %v131 = vpop.trf.xlu0
  %v132 = vpop.trf.xlu0
  %v133 = vpop.trf.xlu0
  %v134 = vpop.trf.xlu0
  %v135 = vpop.trf.xlu0
  %v136 = vpop.trf.xlu0
  %vm137 = vcmask 23552
  %v139 = vsel %vm137, %v121, 0
  %v142 = vsel %vm137, %v122, 0
  %v145 = vsel %vm137, %v123, 0
  %v148 = vsel %vm137, %v124, 0
  %vm150 = vcmask 1042432
  %v152 = vsel %vm150, %v102, 0
  %154 = vmatpush.msra.mxu0 0.0
  %155 = vmatpush.msra.mxu0 0.0
  %156 = vmatpush.msra.mxu0 0.0
  %157 = vmatpush.msra.mxu0 0.0
  %158 = vmatpush.msra.mxu0 0.0
  %159 = vmatpush.msra.mxu0 0.0
  %160 = vmatpush.msra.mxu0 0.0
  %161 = vmatpush.msra.mxu0 0.0
  %162 = vmatpush.msra.mxu0 0.0
  %163 = vmatpush.msra.mxu0 0.0
  %164 = vmatpush.msra.mxu0 0.0
  %165 = vmatpush.msra.mxu0 0.0
  %166 = vmatpush.msra.mxu0 0.0
  %167 = vmatpush.msra.mxu0 0.0
  %168 = vmatpush.msra.mxu0 0.0
  %169 = vmatpush.msra.mxu0 %v152
  %170 = vmatmul.f32.gmra.mxu0 %v139
  %v171 = vpop.f32.mrf.mxu0
  %v172 = vadd.f32 %v104, %v171
  %173 = vmatmul.f32.gmra.mxu0 %v142
  %v174 = vpop.f32.mrf.mxu0
  %v175 = vadd.f32 %v104, %v174
  %176 = vmatmul.f32.gmra.mxu0 %v145
  %v177 = vpop.f32.mrf.mxu0
  %v178 = vadd.f32 %v104, %v177
  %179 = vmatmul.f32.gmra.mxu0 %v148
  %v180 = vpop.f32.mrf.mxu0
  %v181 = vadd.f32 %v104, %v180
  %182 = vdwg.mxu0
  %v183 = vsel %vm80, %v172, -inf
  %184 = vmax.xlane.f32.xlu0 %v183
  %v185 = vpop.xlane.xlu0 %184
  %v186 = vsel %vm80, %v175, -inf
  %187 = vmax.xlane.f32.xlu0 %v186
  %v188 = vpop.xlane.xlu0 %187
  %v189 = vsel %vm80, %v178, -inf
  %190 = vmax.xlane.f32.xlu0 %v189
  %v191 = vpop.xlane.xlu0 %190
  %v192 = vsel %vm80, %v181, -inf
  %193 = vmax.xlane.f32.xlu0 %v192
  %v194 = vpop.xlane.xlu0 %193
  %v195 = vsub.f32 %v172, %v185
  %v196 = vsub.f32 %v175, %v188
  %v197 = vsub.f32 %v178, %v191
  %v198 = vsub.f32 %v181, %v194
  %v199 = vmul.f32 %v195, 1.442695
  %v200 = vpow.pop %v199
  %v201 = vmul.f32 %v196, 1.442695
  %v202 = vpow.pop %v201
  %v203 = vmul.f32 %v197, 1.442695
  %v204 = vpow.pop %v203
  %v205 = vmul.f32 %v198, 1.442695
  %v206 = vpow.pop %v205
  %v207 = vsel %vm80, %v200, 0.0
  %208 = vadd.xlane.f32.xlu0 %v207
  %v209 = vpop.xlane.xlu0 %208
  %v210 = vsel %vm80, %v202, 0.0
  %211 = vadd.xlane.f32.xlu0 %v210
  %v212 = vpop.xlane.xlu0 %211
  %v213 = vsel %vm80, %v204, 0.0
  %214 = vadd.xlane.f32.xlu0 %v213
  %v215 = vpop.xlane.xlu0 %214
  %v216 = vsel %vm80, %v206, 0.0
  %217 = vadd.xlane.f32.xlu0 %v216
  %v218 = vpop.xlane.xlu0 %217
  %v219 = vrcp.pop %v209
  %v220 = vrcp.pop %v212
  %v221 = vrcp.pop %v215
  %v222 = vrcp.pop %v218
  %v223 = vmul.f32 %v200, %v219
  %v224 = vmul.f32 %v202, %v220
  %v225 = vmul.f32 %v204, %v221
  %v226 = vmul.f32 %v206, %v222
  %v228 = vsel %vm80, %v223, 0
  %v231 = vsel %vm80, %v224, 0
  %v234 = vsel %vm80, %v225, 0
  %v237 = vsel %vm80, %v226, 0
  %239 = vmatpush.xpose.msra.mxu0 0.0
  %240 = vmatpush.xpose.msra.mxu0 0.0
  %241 = vmatpush.xpose.msra.mxu0 0.0
  %242 = vmatpush.xpose.msra.mxu0 0.0
  %243 = vmatpush.xpose.msra.mxu0 0.0
  %244 = vmatpush.xpose.msra.mxu0 0.0
  %245 = vmatpush.xpose.msra.mxu0 0.0
  %246 = vmatpush.xpose.msra.mxu0 0.0
  %247 = vmatpush.xpose.msra.mxu0 0.0
  %248 = vmatpush.xpose.msra.mxu0 0.0
  %249 = vmatpush.xpose.msra.mxu0 0.0
  %250 = vmatpush.xpose.msra.mxu0 0.0
  %251 = vmatpush.xpose.msra.mxu0 %v237
  %252 = vmatpush.xpose.msra.mxu0 %v234
  %253 = vmatpush.xpose.msra.mxu0 %v231
  %254 = vmatpush.xpose.msra.mxu0 %v228
  %255 = vmatmul.f32.gmra.mxu0 %v82
  %v256 = vpop.f32.mrf.mxu0
  %v257 = vadd.f32 0.0, %v256
  %258 = vdwg.mxu0
  %v260 = vsel %vm80, %v257, 0
  %262 = vmatpush.msra.mxu0 0.0
  %263 = vmatpush.msra.mxu0 0.0
  %264 = vmatpush.msra.mxu0 0.0
  %265 = vmatpush.msra.mxu0 0.0
  %266 = vmatpush.msra.mxu0 0.0
  %267 = vmatpush.msra.mxu0 0.0
  %268 = vmatpush.msra.mxu0 0.0
  %269 = vmatpush.msra.mxu0 0.0
  %270 = vmatpush.msra.mxu0 0.0
  %271 = vmatpush.msra.mxu0 0.0
  %272 = vmatpush.msra.mxu0 0.0
  %273 = vmatpush.msra.mxu0 0.0
  %274 = vmatpush.msra.mxu0 %v29
  %275 = vmatpush.msra.mxu0 %v28
  %276 = vmatpush.msra.mxu0 %v27
  %277 = vmatpush.msra.mxu0 %v26
  %278 = vmatmul.f32.gmra.mxu0 %v260
  %v279 = vpop.f32.mrf.mxu0
  %v280 = vadd.f32 0.0, %v279
  %281 = vdwg.mxu0
  %v282 = vadd.f32 %v21, %v280
  %v283 = vrot.slane %v257, 1
  %v284 = vsel %vm80, %v283, 0
  %286 = vmatpush.msra.mxu0 0.0
  %287 = vmatpush.msra.mxu0 0.0
  %288 = vmatpush.msra.mxu0 0.0
  %289 = vmatpush.msra.mxu0 0.0
  %290 = vmatpush.msra.mxu0 0.0
  %291 = vmatpush.msra.mxu0 0.0
  %292 = vmatpush.msra.mxu0 0.0
  %293 = vmatpush.msra.mxu0 0.0
  %294 = vmatpush.msra.mxu0 0.0
  %295 = vmatpush.msra.mxu0 0.0
  %296 = vmatpush.msra.mxu0 0.0
  %297 = vmatpush.msra.mxu0 0.0
  %298 = vmatpush.msra.mxu0 %v33
  %299 = vmatpush.msra.mxu0 %v32
  %300 = vmatpush.msra.mxu0 %v31
  %301 = vmatpush.msra.mxu0 %v30
  %302 = vmatmul.f32.gmra.mxu0 %v284
  %v303 = vpop.f32.mrf.mxu0
  %v304 = vadd.f32 0.0, %v303
  %305 = vdwg.mxu0
  %v306 = vadd.f32 %v282, %v304
  %v307 = vrot.slane %v257, 2
  %v308 = vsel %vm80, %v307, 0
  %310 = vmatpush.msra.mxu0 0.0
  %311 = vmatpush.msra.mxu0 0.0
  %312 = vmatpush.msra.mxu0 0.0
  %313 = vmatpush.msra.mxu0 0.0
  %314 = vmatpush.msra.mxu0 0.0
  %315 = vmatpush.msra.mxu0 0.0
  %316 = vmatpush.msra.mxu0 0.0
  %317 = vmatpush.msra.mxu0 0.0
  %318 = vmatpush.msra.mxu0 0.0
  %319 = vmatpush.msra.mxu0 0.0
  %320 = vmatpush.msra.mxu0 0.0
  %321 = vmatpush.msra.mxu0 0.0
  %322 = vmatpush.msra.mxu0 %v37
  %323 = vmatpush.msra.mxu0 %v36
  %324 = vmatpush.msra.mxu0 %v35
  %325 = vmatpush.msra.mxu0 %v34
  %326 = vmatmul.f32.gmra.mxu0 %v308
  %v327 = vpop.f32.mrf.mxu0
  %v328 = vadd.f32 0.0, %v327
  %329 = vdwg.mxu0
  %v330 = vadd.f32 %v306, %v328
  %v331 = vmax.f32 %v330, 0.0
  %v333 = vsel %vm80, %v331, 0
  %335 = vmatpush.msra.mxu0 0.0
  %336 = vmatpush.msra.mxu0 0.0
  %337 = vmatpush.msra.mxu0 0.0
  %338 = vmatpush.msra.mxu0 0.0
  %339 = vmatpush.msra.mxu0 0.0
  %340 = vmatpush.msra.mxu0 0.0
  %341 = vmatpush.msra.mxu0 0.0
  %342 = vmatpush.msra.mxu0 0.0
  %343 = vmatpush.msra.mxu0 0.0
  %344 = vmatpush.msra.mxu0 0.0
  %345 = vmatpush.msra.mxu0 0.0
  %346 = vmatpush.msra.mxu0 0.0
  %347 = vmatpush.msra.mxu0 %v45
  %348 = vmatpush.msra.mxu0 %v44
  %349 = vmatpush.msra.mxu0 %v43
  %350 = vmatpush.msra.mxu0 %v42
  %351 = vmatmul.f32.gmra.mxu0 %v333
  %v352 = vpop.f32.mrf.mxu0
  %v353 = vadd.f32 %v22, %v352
  %354 = vdwg.mxu0
  %v355 = vadd.f32 %v79, %v353
  %v357 = vsel %vm80, %v355, 0
  %359 = vmatpush.msra.mxu0 0.0
  %360 = vmatpush.msra.mxu0 0.0
  %361 = vmatpush.msra.mxu0 0.0
  %362 = vmatpush.msra.mxu0 0.0
  %363 = vmatpush.msra.mxu0 0.0
  %364 = vmatpush.msra.mxu0 0.0
  %365 = vmatpush.msra.mxu0 0.0
  %366 = vmatpush.msra.mxu0 0.0
  %367 = vmatpush.msra.mxu0 0.0
  %368 = vmatpush.msra.mxu0 0.0
  %369 = vmatpush.msra.mxu0 0.0
  %370 = vmatpush.msra.mxu0 0.0
  %371 = vmatpush.msra.mxu0 %v49
  %372 = vmatpush.msra.mxu0 %v48
  %373 = vmatpush.msra.mxu0 %v47
  %374 = vmatpush.msra.mxu0 %v46
  %375 = vmatmul.f32.gmra.mxu0 %v357
  %v376 = vpop.f32.mrf.mxu0
  %v377 = vadd.f32 %v23, %v376
  %378 = vdwg.mxu0
  %v379 = vxor.u32 %v377, 2147483648
  %v380 = vmul.f32 %v379, 1.442695
  %v381 = vpow.pop %v380
  %v382 = vadd.f32 %v381, 1.0
  %v383 = vrcp.pop %v382
  %v384 = vmul.f32 %v382, %v383
  %v385 = vsub.f32 1.0, %v384
  %v386 = vmul.f32 %v383, %v385
  %v387 = vadd.f32 %v383, %v386
  %vm388 = vweird.f32 %v382
  %vm389 = vweird.f32 %v383
  %vm390 = vmor %vm388, %vm389
  %v391 = vsel %vm390, %v383, %v387
  %v392 = vand.u32 2147483647, %v382
  %vm393 = vcmp.eq.f32.partialorder %v392, 8.507059e+37
  %v394 = vand.u32 %v382, 2147483648
  %v395 = vor.u32 1.1754944e-38, %v394
  %v396 = vsel %vm393, %v395, %v391
  %v397 = vmul.f32 1.0, %v396
  %v398 = vmul.f32 %v397, %v79
  %v399 = vadd.f32 %v398, %v353
  %v401 = vsel %vm80, %v399, 0
  %403 = vmatpush.msra.mxu0 0.0
  %404 = vmatpush.msra.mxu0 0.0
  %405 = vmatpush.msra.mxu0 0.0
  %406 = vmatpush.msra.mxu0 0.0
  %407 = vmatpush.msra.mxu0 0.0
  %408 = vmatpush.msra.mxu0 0.0
  %409 = vmatpush.msra.mxu0 0.0
  %410 = vmatpush.msra.mxu0 0.0
  %411 = vmatpush.msra.mxu0 0.0
  %412 = vmatpush.msra.mxu0 0.0
  %413 = vmatpush.msra.mxu0 0.0
  %414 = vmatpush.msra.mxu0 0.0
  %415 = vmatpush.msra.mxu0 %v53
  %416 = vmatpush.msra.mxu0 %v52
  %417 = vmatpush.msra.mxu0 %v51
  %418 = vmatpush.msra.mxu0 %v50
  %419 = vmatmul.f32.gmra.mxu0 %v401
  %v420 = vpop.f32.mrf.mxu0
  %v421 = vadd.f32 %v24, %v420
  %422 = vdwg.mxu0
  %v423 = vmax.f32 %v421, 0.0
  %v425 = vsel %vm80, %v423, 0
  %v428 = vsel %vm80, %v54, 0
  %v431 = vsel %vm80, %v55, 0
  %v434 = vsel %vm80, %v56, 0
  %v437 = vsel %vm80, %v57, 0
  %v440 = vsel %vm80, %v58, 0
  %v443 = vsel %vm80, %v59, 0
  %v446 = vsel %vm80, %v60, 0
  %v449 = vsel %vm80, %v61, 0
  %v452 = vsel %vm80, %v62, 0
  %v455 = vsel %vm80, %v63, 0
  %v458 = vsel %vm80, %v64, 0
  %v461 = vsel %vm80, %v65, 0
  %463 = vmatpush.xpose.msra.mxu0 0.0
  %464 = vmatpush.xpose.msra.mxu0 0.0
  %465 = vmatpush.xpose.msra.mxu0 0.0
  %466 = vmatpush.xpose.msra.mxu0 0.0
  %467 = vmatpush.xpose.msra.mxu0 %v461
  %468 = vmatpush.xpose.msra.mxu0 %v458
  %469 = vmatpush.xpose.msra.mxu0 %v455
  %470 = vmatpush.xpose.msra.mxu0 %v452
  %471 = vmatpush.xpose.msra.mxu0 %v449
  %472 = vmatpush.xpose.msra.mxu0 %v446
  %473 = vmatpush.xpose.msra.mxu0 %v443
  %474 = vmatpush.xpose.msra.mxu0 %v440
  %475 = vmatpush.xpose.msra.mxu0 %v437
  %476 = vmatpush.xpose.msra.mxu0 %v434
  %477 = vmatpush.xpose.msra.mxu0 %v431
  %478 = vmatpush.xpose.msra.mxu0 %v428
  %479 = vmatmul.f32.gmra.mxu0 %v425
  %v480 = vpop.f32.mrf.mxu0
  %v481 = vadd.f32 %v25, %v480
  %482 = vdwg.mxu0
  %s483 = scalar_lea.vmem %s0, 4
  %v484 = vld [vmem:[%s483] sm:$0x7]
  %v485 = vld [vmem:[%s1 + $0x1] sm:$0x1]
  %v487 = vsel %vm80, %v484, 0
  %489 = vmatpush.msra.mxu0 0.0
  %490 = vmatpush.msra.mxu0 0.0
  %491 = vmatpush.msra.mxu0 0.0
  %492 = vmatpush.msra.mxu0 0.0
  %493 = vmatpush.msra.mxu0 0.0
  %494 = vmatpush.msra.mxu0 0.0
  %495 = vmatpush.msra.mxu0 0.0
  %496 = vmatpush.msra.mxu0 0.0
  %497 = vmatpush.msra.mxu0 0.0
  %498 = vmatpush.msra.mxu0 0.0
  %499 = vmatpush.msra.mxu0 0.0
  %500 = vmatpush.msra.mxu0 0.0
  %501 = vmatpush.msra.mxu0 %v41
  %502 = vmatpush.msra.mxu0 %v40
  %503 = vmatpush.msra.mxu0 %v39
  %504 = vmatpush.msra.mxu0 %v38
  %505 = vmatmul.f32.gmra.mxu0 %v487
  %v506 = vpop.f32.mrf.mxu0
  %v507 = vadd.f32 0.0, %v506
  %508 = vdwg.mxu0
  %509 = vxpose.xlu0.b32.start [1/16] %v484, 128
  %510 = vxpose.xlu0.b32.cont [2/16] 0.0, 128
  %511 = vxpose.xlu0.b32.cont [3/16] 0.0, 128
  %512 = vxpose.xlu0.b32.cont [4/16] 0.0, 128
  %513 = vxpose.xlu0.b32.cont [5/16] 0.0, 128
  %514 = vxpose.xlu0.b32.cont [6/16] 0.0, 128
  %515 = vxpose.xlu0.b32.cont [7/16] 0.0, 128
  %516 = vxpose.xlu0.b32.cont [8/16] 0.0, 128
  %517 = vxpose.xlu0.b32.cont [9/16] 0.0, 128
  %518 = vxpose.xlu0.b32.cont [10/16] 0.0, 128
  %519 = vxpose.xlu0.b32.cont [11/16] 0.0, 128
  %520 = vxpose.xlu0.b32.cont [12/16] 0.0, 128
  %521 = vxpose.xlu0.b32.cont [13/16] 0.0, 128
  %522 = vxpose.xlu0.b32.cont [14/16] 0.0, 128
  %523 = vxpose.xlu0.b32.cont [15/16] 0.0, 128
  %524 = vxpose.xlu0.b32.end [16/16] 0.0, 128
  %v525 = vpop.trf.xlu0
  %v526 = vpop.trf.xlu0
  %v527 = vpop.trf.xlu0
  %v528 = vpop.trf.xlu0
  %v529 = vpop.trf.xlu0
  %v530 = vpop.trf.xlu0
  %v531 = vpop.trf.xlu0
  %v532 = vpop.trf.xlu0
  %v533 = vpop.trf.xlu0
  %v534 = vpop.trf.xlu0
  %v535 = vpop.trf.xlu0
  %v536 = vpop.trf.xlu0
  %v537 = vpop.trf.xlu0
  %v538 = vpop.trf.xlu0
  %v539 = vpop.trf.xlu0
  %v540 = vpop.trf.xlu0
  %v542 = vsel %vm137, %v525, 0
  %v545 = vsel %vm137, %v526, 0
  %v548 = vsel %vm137, %v527, 0
  %v551 = vsel %vm137, %v528, 0
  %v554 = vsel %vm150, %v507, 0
  %556 = vmatpush.msra.mxu0 0.0
  %557 = vmatpush.msra.mxu0 0.0
  %558 = vmatpush.msra.mxu0 0.0
  %559 = vmatpush.msra.mxu0 0.0
  %560 = vmatpush.msra.mxu0 0.0
  %561 = vmatpush.msra.mxu0 0.0
  %562 = vmatpush.msra.mxu0 0.0
  %563 = vmatpush.msra.mxu0 0.0
  %564 = vmatpush.msra.mxu0 0.0
  %565 = vmatpush.msra.mxu0 0.0
  %566 = vmatpush.msra.mxu0 0.0
  %567 = vmatpush.msra.mxu0 0.0
  %568 = vmatpush.msra.mxu0 0.0
  %569 = vmatpush.msra.mxu0 0.0
  %570 = vmatpush.msra.mxu0 0.0
  %571 = vmatpush.msra.mxu0 %v554
  %572 = vmatmul.f32.gmra.mxu0 %v542
  %v573 = vpop.f32.mrf.mxu0
  %v574 = vadd.f32 %v104, %v573
  %575 = vmatmul.f32.gmra.mxu0 %v545
  %v576 = vpop.f32.mrf.mxu0
  %v577 = vadd.f32 %v104, %v576
  %578 = vmatmul.f32.gmra.mxu0 %v548
  %v579 = vpop.f32.mrf.mxu0
  %v580 = vadd.f32 %v104, %v579
  %581 = vmatmul.f32.gmra.mxu0 %v551
  %v582 = vpop.f32.mrf.mxu0
  %v583 = vadd.f32 %v104, %v582
  %584 = vdwg.mxu0
  %v585 = vsel %vm80, %v574, -inf
  %586 = vmax.xlane.f32.xlu0 %v585
  %v587 = vpop.xlane.xlu0 %586
  %v588 = vsel %vm80, %v577, -inf
  %589 = vmax.xlane.f32.xlu0 %v588
  %v590 = vpop.xlane.xlu0 %589
  %v591 = vsel %vm80, %v580, -inf
  %592 = vmax.xlane.f32.xlu0 %v591
  %v593 = vpop.xlane.xlu0 %592
  %v594 = vsel %vm80, %v583, -inf
  %595 = vmax.xlane.f32.xlu0 %v594
  %v596 = vpop.xlane.xlu0 %595
  %v597 = vsub.f32 %v574, %v587
  %v598 = vsub.f32 %v577, %v590
  %v599 = vsub.f32 %v580, %v593
  %v600 = vsub.f32 %v583, %v596
  %v601 = vmul.f32 %v597, 1.442695
  %v602 = vpow.pop %v601
  %v603 = vmul.f32 %v598, 1.442695
  %v604 = vpow.pop %v603
  %v605 = vmul.f32 %v599, 1.442695
  %v606 = vpow.pop %v605
  %v607 = vmul.f32 %v600, 1.442695
  %v608 = vpow.pop %v607
  %v609 = vsel %vm80, %v602, 0.0
  %610 = vadd.xlane.f32.xlu0 %v609
  %v611 = vpop.xlane.xlu0 %610
  %v612 = vsel %vm80, %v604, 0.0
  %613 = vadd.xlane.f32.xlu0 %v612
  %v614 = vpop.xlane.xlu0 %613
  %v615 = vsel %vm80, %v606, 0.0
  %616 = vadd.xlane.f32.xlu0 %v615
  %v617 = vpop.xlane.xlu0 %616
  %v618 = vsel %vm80, %v608, 0.0
  %619 = vadd.xlane.f32.xlu0 %v618
  %v620 = vpop.xlane.xlu0 %619
  %v621 = vrcp.pop %v611
  %v622 = vrcp.pop %v614
  %v623 = vrcp.pop %v617
  %v624 = vrcp.pop %v620
  %v625 = vmul.f32 %v602, %v621
  %v626 = vmul.f32 %v604, %v622
  %v627 = vmul.f32 %v606, %v623
  %v628 = vmul.f32 %v608, %v624
  %v630 = vsel %vm80, %v625, 0
  %v633 = vsel %vm80, %v626, 0
  %v636 = vsel %vm80, %v627, 0
  %v639 = vsel %vm80, %v628, 0
  %641 = vmatpush.xpose.msra.mxu0 0.0
  %642 = vmatpush.xpose.msra.mxu0 0.0
  %643 = vmatpush.xpose.msra.mxu0 0.0
  %644 = vmatpush.xpose.msra.mxu0 0.0
  %645 = vmatpush.xpose.msra.mxu0 0.0
  %646 = vmatpush.xpose.msra.mxu0 0.0
  %647 = vmatpush.xpose.msra.mxu0 0.0
  %648 = vmatpush.xpose.msra.mxu0 0.0
  %649 = vmatpush.xpose.msra.mxu0 0.0
  %650 = vmatpush.xpose.msra.mxu0 0.0
  %651 = vmatpush.xpose.msra.mxu0 0.0
  %652 = vmatpush.xpose.msra.mxu0 0.0
  %653 = vmatpush.xpose.msra.mxu0 %v639
  %654 = vmatpush.xpose.msra.mxu0 %v636
  %655 = vmatpush.xpose.msra.mxu0 %v633
  %656 = vmatpush.xpose.msra.mxu0 %v630
  %657 = vmatmul.f32.gmra.mxu0 %v487
  %v658 = vpop.f32.mrf.mxu0
  %v659 = vadd.f32 0.0, %v658
  %660 = vdwg.mxu0
  %v662 = vsel %vm80, %v659, 0
  %664 = vmatpush.msra.mxu0 0.0
  %665 = vmatpush.msra.mxu0 0.0
  %666 = vmatpush.msra.mxu0 0.0
  %667 = vmatpush.msra.mxu0 0.0
  %668 = vmatpush.msra.mxu0 0.0
  %669 = vmatpush.msra.mxu0 0.0
  %670 = vmatpush.msra.mxu0 0.0
  %671 = vmatpush.msra.mxu0 0.0
  %672 = vmatpush.msra.mxu0 0.0
  %673 = vmatpush.msra.mxu0 0.0
  %674 = vmatpush.msra.mxu0 0.0
  %675 = vmatpush.msra.mxu0 0.0
  %676 = vmatpush.msra.mxu0 %v29
  %677 = vmatpush.msra.mxu0 %v28
  %678 = vmatpush.msra.mxu0 %v27
  %679 = vmatpush.msra.mxu0 %v26
  %680 = vmatmul.f32.gmra.mxu0 %v662
  %v681 = vpop.f32.mrf.mxu0
  %v682 = vadd.f32 0.0, %v681
  %683 = vdwg.mxu0
  %v684 = vadd.f32 %v21, %v682
  %v685 = vrot.slane %v659, 1
  %v686 = vsel %vm80, %v685, 0
  %688 = vmatpush.msra.mxu0 0.0
  %689 = vmatpush.msra.mxu0 0.0
  %690 = vmatpush.msra.mxu0 0.0
  %691 = vmatpush.msra.mxu0 0.0
  %692 = vmatpush.msra.mxu0 0.0
  %693 = vmatpush.msra.mxu0 0.0
  %694 = vmatpush.msra.mxu0 0.0
  %695 = vmatpush.msra.mxu0 0.0
  %696 = vmatpush.msra.mxu0 0.0
  %697 = vmatpush.msra.mxu0 0.0
  %698 = vmatpush.msra.mxu0 0.0
  %699 = vmatpush.msra.mxu0 0.0
  %700 = vmatpush.msra.mxu0 %v33
  %701 = vmatpush.msra.mxu0 %v32
  %702 = vmatpush.msra.mxu0 %v31
  %703 = vmatpush.msra.mxu0 %v30
  %704 = vmatmul.f32.gmra.mxu0 %v686
  %v705 = vpop.f32.mrf.mxu0
  %v706 = vadd.f32 0.0, %v705
  %707 = vdwg.mxu0
  %v708 = vadd.f32 %v684, %v706
  %v709 = vrot.slane %v659, 2
  %v710 = vsel %vm80, %v709, 0
  %712 = vmatpush.msra.mxu0 0.0
  %713 = vmatpush.msra.mxu0 0.0
  %714 = vmatpush.msra.mxu0 0.0
  %715 = vmatpush.msra.mxu0 0.0
  %716 = vmatpush.msra.mxu0 0.0
  %717 = vmatpush.msra.mxu0 0.0
  %718 = vmatpush.msra.mxu0 0.0
  %719 = vmatpush.msra.mxu0 0.0
  %720 = vmatpush.msra.mxu0 0.0
  %721 = vmatpush.msra.mxu0 0.0
  %722 = vmatpush.msra.mxu0 0.0
  %723 = vmatpush.msra.mxu0 0.0
  %724 = vmatpush.msra.mxu0 %v37
  %725 = vmatpush.msra.mxu0 %v36
  %726 = vmatpush.msra.mxu0 %v35
  %727 = vmatpush.msra.mxu0 %v34
  %728 = vmatmul.f32.gmra.mxu0 %v710
  %v729 = vpop.f32.mrf.mxu0
  %v730 = vadd.f32 0.0, %v729
  %731 = vdwg.mxu0
  %v732 = vadd.f32 %v708, %v730
  %v733 = vmax.f32 %v732, 0.0
  %v735 = vsel %vm80, %v733, 0
  %737 = vmatpush.msra.mxu0 0.0
  %738 = vmatpush.msra.mxu0 0.0
  %739 = vmatpush.msra.mxu0 0.0
  %740 = vmatpush.msra.mxu0 0.0
  %741 = vmatpush.msra.mxu0 0.0
  %742 = vmatpush.msra.mxu0 0.0
  %743 = vmatpush.msra.mxu0 0.0
  %744 = vmatpush.msra.mxu0 0.0
  %745 = vmatpush.msra.mxu0 0.0
  %746 = vmatpush.msra.mxu0 0.0
  %747 = vmatpush.msra.mxu0 0.0
  %748 = vmatpush.msra.mxu0 0.0
  %749 = vmatpush.msra.mxu0 %v45
  %750 = vmatpush.msra.mxu0 %v44
  %751 = vmatpush.msra.mxu0 %v43
  %752 = vmatpush.msra.mxu0 %v42
  %753 = vmatmul.f32.gmra.mxu0 %v735
  %v754 = vpop.f32.mrf.mxu0
  %v755 = vadd.f32 %v22, %v754
  %756 = vdwg.mxu0
  %v757 = vadd.f32 %v485, %v755
  %v759 = vsel %vm80, %v757, 0
  %761 = vmatpush.msra.mxu0 0.0
  %762 = vmatpush.msra.mxu0 0.0
  %763 = vmatpush.msra.mxu0 0.0
  %764 = vmatpush.msra.mxu0 0.0
  %765 = vmatpush.msra.mxu0 0.0
  %766 = vmatpush.msra.mxu0 0.0
  %767 = vmatpush.msra.mxu0 0.0
  %768 = vmatpush.msra.mxu0 0.0
  %769 = vmatpush.msra.mxu0 0.0
  %770 = vmatpush.msra.mxu0 0.0
  %771 = vmatpush.msra.mxu0 0.0
  %772 = vmatpush.msra.mxu0 0.0
  %773 = vmatpush.msra.mxu0 %v49
  %774 = vmatpush.msra.mxu0 %v48
  %775 = vmatpush.msra.mxu0 %v47
  %776 = vmatpush.msra.mxu0 %v46
  %777 = vmatmul.f32.gmra.mxu0 %v759
  %v778 = vpop.f32.mrf.mxu0
  %v779 = vadd.f32 %v23, %v778
  %780 = vdwg.mxu0
  %v781 = vxor.u32 %v779, 2147483648
  %v782 = vmul.f32 %v781, 1.442695
  %v783 = vpow.pop %v782
  %v784 = vadd.f32 %v783, 1.0
  %v785 = vrcp.pop %v784
  %v786 = vmul.f32 %v784, %v785
  %v787 = vsub.f32 1.0, %v786
  %v788 = vmul.f32 %v785, %v787
  %v789 = vadd.f32 %v785, %v788
  %vm790 = vweird.f32 %v784
  %vm791 = vweird.f32 %v785
  %vm792 = vmor %vm790, %vm791
  %v793 = vsel %vm792, %v785, %v789
  %v794 = vand.u32 2147483647, %v784
  %vm795 = vcmp.eq.f32.partialorder %v794, 8.507059e+37
  %v796 = vand.u32 %v784, 2147483648
  %v797 = vor.u32 1.1754944e-38, %v796
  %v798 = vsel %vm795, %v797, %v793
  %v799 = vmul.f32 1.0, %v798
  %v800 = vmul.f32 %v799, %v485
  %v801 = vadd.f32 %v800, %v755
  %v803 = vsel %vm80, %v801, 0
  %805 = vmatpush.msra.mxu0 0.0
  %806 = vmatpush.msra.mxu0 0.0
  %807 = vmatpush.msra.mxu0 0.0
  %808 = vmatpush.msra.mxu0 0.0
  %809 = vmatpush.msra.mxu0 0.0
  %810 = vmatpush.msra.mxu0 0.0
  %811 = vmatpush.msra.mxu0 0.0
  %812 = vmatpush.msra.mxu0 0.0
  %813 = vmatpush.msra.mxu0 0.0
  %814 = vmatpush.msra.mxu0 0.0
  %815 = vmatpush.msra.mxu0 0.0
  %816 = vmatpush.msra.mxu0 0.0
  %817 = vmatpush.msra.mxu0 %v53
  %818 = vmatpush.msra.mxu0 %v52
  %819 = vmatpush.msra.mxu0 %v51
  %820 = vmatpush.msra.mxu0 %v50
  %821 = vmatmul.f32.gmra.mxu0 %v803
  %v822 = vpop.f32.mrf.mxu0
  %v823 = vadd.f32 %v24, %v822
  %824 = vdwg.mxu0
  %v825 = vmax.f32 %v823, 0.0
  %v827 = vsel %vm80, %v825, 0
  %829 = vmatpush.xpose.msra.mxu0 0.0
  %830 = vmatpush.xpose.msra.mxu0 0.0
  %831 = vmatpush.xpose.msra.mxu0 0.0
  %832 = vmatpush.xpose.msra.mxu0 0.0
  %833 = vmatpush.xpose.msra.mxu0 %v461
  %834 = vmatpush.xpose.msra.mxu0 %v458
  %835 = vmatpush.xpose.msra.mxu0 %v455
  %836 = vmatpush.xpose.msra.mxu0 %v452
  %837 = vmatpush.xpose.msra.mxu0 %v449
  %838 = vmatpush.xpose.msra.mxu0 %v446
  %839 = vmatpush.xpose.msra.mxu0 %v443
  %840 = vmatpush.xpose.msra.mxu0 %v440
  %841 = vmatpush.xpose.msra.mxu0 %v437
  %842 = vmatpush.xpose.msra.mxu0 %v434
  %843 = vmatpush.xpose.msra.mxu0 %v431
  %844 = vmatpush.xpose.msra.mxu0 %v428
  %845 = vmatmul.f32.gmra.mxu0 %v827
  %v846 = vpop.f32.mrf.mxu0
  %v847 = vadd.f32 %v25, %v846
  %848 = vdwg.mxu0
  %v850 = vrot.slane %v847, 7
  %vm852 = vcmask 1040384
  %v853 = vsel %vm852, %v481, %v850
  %vm854 = vcmask 785408
  %v856 = vsel %vm854, %v853, 0
  %858 = vmatpush.msra.mxu0 0.0
  %859 = vmatpush.msra.mxu0 0.0
  %860 = vmatpush.msra.mxu0 0.0
  %861 = vmatpush.msra.mxu0 0.0
  %862 = vmatpush.msra.mxu0 %v77
  %863 = vmatpush.msra.mxu0 %v76
  %864 = vmatpush.msra.mxu0 %v75
  %865 = vmatpush.msra.mxu0 %v74
  %866 = vmatpush.msra.mxu0 %v73
  %867 = vmatpush.msra.mxu0 %v72
  %868 = vmatpush.msra.mxu0 %v71
  %869 = vmatpush.msra.mxu0 %v70
  %870 = vmatpush.msra.mxu0 %v69
  %871 = vmatpush.msra.mxu0 %v68
  %872 = vmatpush.msra.mxu0 %v67
  %873 = vmatpush.msra.mxu0 %v66
  %874 = vmatmul.f32.gmra.mxu0 %v856
  %v875 = vpop.f32.mrf.mxu0
  %v876 = vadd.f32 0.0, %v875
  %877 = vdwg.mxu0
  %vm878 = vcmask 91136
  %879 = vst.msk [vmem:[%s5] sm:$0x3] %vm878, %v876
  // Predicated region
  $region22: #{model_forward.1} parent=0 // pred_check
    _
  $region23: #{model_forward.1} parent=0 // pred_check_branch
    %881 = sbr.rel (0) target = $region25
  $region24: #{model_forward.1} parent=0 // pred_region
    _
  $region25: #{model_forward.1} parent=0 // pred_fallthru
    _
  // Predicated region
  $region26: #{model_forward.1} parent=0 // pred_check
    _
  $region27: #{model_forward.1} parent=0 // pred_check_branch
    %883 = sbr.rel (0) target = $region29
  $region28: #{model_forward.1} parent=0 // pred_region
    _
  $region29: #{model_forward.1} parent=0 // pred_fallthru
    _

</llo_original>
